<compile_context>
chip_gen: v7x
topology: tpu7x:2x2x1
jax: 0.10.0
libtpu: 0.0.40
codegen_flags: <defaults>
</compile_context>

<pallas_src>
import functools

import numpy as np
import jax
import jax.numpy as jnp
from jax.experimental import pallas as pl
from jax.experimental.pallas import tpu as pltpu


def _dialog_act_kernel(enc_ref, w_ref, b_ref, start_ref, end_ref, out_ref, *,
                       d_out_valid):
    # enc_ref:   (Bt, S, D_in)   compute dtype (f32 or bf16)
    # w_ref:     (D_in, Dp)      compute dtype, Dp = D_out padded to 128
    # b_ref:     (1, Dp)         f32
    # start_ref: (Bt, M, 1)      int32
    # end_ref:   (Bt, M, 1)      int32
    # out_ref:   (Bt, M, Dp)     f32
    enc = enc_ref[...]
    w = w_ref[...]
    bias = b_ref[...]
    starts = start_ref[...]
    ends = end_ref[...]

    bt, s_len, d_in = enc.shape
    m = starts.shape[1]
    dp = w.shape[1]

    # Segment membership mask (Bt, M, S): mask[b, j, t] = start <= t < end.
    # Long S axis on lanes -> canonical MXU feed, no XLU transpose.
    t_idx = jax.lax.broadcasted_iota(jnp.int32, (bt, m, s_len), 2)
    mask = ((t_idx >= starts) & (t_idx < ends)).astype(enc.dtype)

    # seg_enc[b, j, :] = sum over the segment's encoder rows  -> (Bt, M, D_in)
    # (lane-dense free dim = D_in; f32 accumulation on the MXU).
    seg_enc = jnp.einsum("bms,bsd->bmd", mask, enc,
                         preferred_element_type=jnp.float32)

    # Project the (tiny) summed vectors.  The bias is linear, so
    # sum_t (enc[t] @ W + b) == (sum_t enc[t]) @ W + n * b.
    counts = (ends - starts).astype(jnp.float32)                 # (Bt, M, 1)
    seg2d = jnp.dot(seg_enc.reshape(bt * m, d_in).astype(w.dtype), w,
                    preferred_element_type=jnp.float32)          # (Bt*M, Dp)
    seg = seg2d.reshape(bt, m, dp) + counts * bias               # (Bt, M, Dp)

    # Exclude the lane-padding columns from the log-softmax normalization.
    col = jax.lax.broadcasted_iota(jnp.int32, (bt, m, dp), 2)
    logits = jnp.where(col < d_out_valid, seg, jnp.float32(-1e30))

    mx = jnp.max(logits, axis=-1, keepdims=True)
    z = logits - mx
    lse = jnp.log(jnp.sum(jnp.exp(z), axis=-1, keepdims=True))
    out_ref[...] = z - lse


def _pick_batch_block(B, max_bt=16):
    """Largest divisor of B that is <= max_bt while keeping the parallel grid
    extent >= 2 (v7x has 2 TensorCores)."""
    best = 1
    for bt in range(1, min(max_bt, B) + 1):
        if B % bt == 0 and (B // bt >= 2 or B == 1):
            best = bt
    return best


def _estimate_vmem_bytes(bt, S, D_in, M, Dp, enc_itemsize):
    enc_blk = bt * S * D_in * enc_itemsize * 2      # double-buffered input
    w_blk = D_in * Dp * enc_itemsize * 2
    b_blk = Dp * 4 * 2
    idx_blk = 2 * bt * M * 4 * 2
    out_blk = bt * M * Dp * 4 * 2
    interm = bt * M * (S + D_in + 3 * Dp) * 4       # mask / seg_enc / logits
    return enc_blk + w_blk + b_blk + idx_blk + out_blk + interm


def dialog_act_labeller(enc_output, weight_t, bias, starts, ends, *,
                        compute_dtype=jnp.float32, batch_block=None):
    """enc_output: (B, S, D_in); weight_t: (D_in, D_out); bias: (D_out,)
    starts/ends: (B, M) int32 segment boundaries.  Returns (B, M, D_out) f32
    log-probabilities (exactly the torch module's forward output)."""
    B, S, D_in = enc_output.shape
    D_out = weight_t.shape[1]
    M = starts.shape[1]

    # Lane-dense output: pad the label dim up to a multiple of 128.
    Dp = ((D_out + 127) // 128) * 128
    w_pad = jnp.pad(weight_t, ((0, 0), (0, Dp - D_out)))
    b_pad = jnp.pad(bias, (0, Dp - D_out)).reshape(1, Dp).astype(jnp.float32)

    if compute_dtype == jnp.bfloat16:
        # Cast in the wrapper: halves the dominant HBM->VMEM stream and feeds
        # the MXU at bf16 peak (accumulation stays f32 inside the kernel).
        enc_output = enc_output.astype(jnp.bfloat16)
        w_pad = w_pad.astype(jnp.bfloat16)
    else:
        enc_output = enc_output.astype(compute_dtype)
        w_pad = w_pad.astype(compute_dtype)

    starts3 = starts.reshape(B, M, 1).astype(jnp.int32)
    ends3 = ends.reshape(B, M, 1).astype(jnp.int32)

    bt = batch_block if batch_block is not None else _pick_batch_block(B)
    assert B % bt == 0, "batch_block must divide the batch size"
    grid = (B // bt,)

    enc_isz = jnp.dtype(enc_output.dtype).itemsize
    est = _estimate_vmem_bytes(bt, S, D_in, M, Dp, enc_isz)
    cp_kwargs = dict(dimension_semantics=("parallel",))
    if est > 12 * (1 << 20):
        # Raise the scoped-VMEM cap above the 16/32 MiB v5e/v6e defaults when
        # the blocks are big; cap at v7x's 64 MiB physical VMEM.
        cp_kwargs["vmem_limit_bytes"] = int(min(2 * est, 64 * (1 << 20)))

    out_pad = pl.pallas_call(
        functools.partial(_dialog_act_kernel, d_out_valid=D_out),
        out_shape=jax.ShapeDtypeStruct((B, M, Dp), jnp.float32),
        grid_spec=pltpu.PrefetchScalarGridSpec(
            num_scalar_prefetch=0,
            grid=grid,
            in_specs=[
                pl.BlockSpec((bt, S, D_in), lambda i: (i, 0, 0)),
                # Constant block index -> the small padded weight stays
                # resident in VMEM; no per-step re-DMA.
                pl.BlockSpec((D_in, Dp), lambda i: (0, 0)),
                pl.BlockSpec((1, Dp), lambda i: (0, 0)),
                pl.BlockSpec((bt, M, 1), lambda i: (i, 0, 0)),
                pl.BlockSpec((bt, M, 1), lambda i: (i, 0, 0)),
            ],
            out_specs=pl.BlockSpec((bt, M, Dp), lambda i: (i, 0, 0)),
        ),
        compiler_params=pltpu.CompilerParams(**cp_kwargs),
    )(enc_output, w_pad, b_pad, starts3, ends3)

    # Drop the lane-padding columns (cheap XLA slice outside the kernel).
    return out_pad[:, :, :D_out]


def build_segment_tables(cls_pos, last_sep, max_num_sent, seq_len):
    """Mirror of the PyTorch per-batch loop -> (start, end) index tables."""
    B = len(cls_pos)
    starts = np.zeros((B, max_num_sent), dtype=np.int32)
    ends = np.zeros((B, max_num_sent), dtype=np.int32)
    for i in range(B):
        ns = len(cls_pos[i])
        for j in range(ns - 1):
            starts[i, j] = cls_pos[i][j]
            ends[i, j] = cls_pos[i][j + 1]
        if ns > 1:
            idx1 = cls_pos[i][ns - 1]
        else:
            idx1 = 0
        idx2 = int(last_sep[i]) + 1
        j = ns - 1
        if idx2 > idx1:
            starts[i, j] = idx1
            ends[i, j] = idx2
        elif idx2 == idx1:
            starts[i, j] = idx1
            ends[i, j] = seq_len  # torch: sum x[i, idx1:, :]
        else:
            raise RuntimeError("something wrong #1")
        # rows j >= ns stay (0, 0): empty segment -> zero sum, like torch zeros
    return starts, ends


def _reference(enc_output, weight_t, bias, starts, ends):
    """Pure numpy reference replicating the torch semantics exactly
    (project with the linear layer first, then sum per segment)."""
    enc = np.asarray(enc_output, dtype=np.float32)
    W = np.asarray(weight_t, dtype=np.float32)
    b = np.asarray(bias, dtype=np.float32)
    x = enc @ W + b
    B, S, _ = enc.shape
    M = starts.shape[1]
    D_out = W.shape[1]
    seg = np.zeros((B, M, D_out), dtype=np.float32)
    for i in range(B):
        for j in range(M):
            s, e = int(starts[i, j]), int(ends[i, j])
            if e > s:
                seg[i, j, :] = x[i, s:e, :].sum(axis=0)
    mx = seg.max(axis=-1, keepdims=True)
    z = seg - mx
    return z - np.log(np.exp(z).sum(axis=-1, keepdims=True))


if __name__ == "__main__":
    B, S, D_in, D_out = 4, 16, 32, 8
    max_num_sent = 4

    key = jax.random.PRNGKey(0)
    k_enc, k_w = jax.random.split(key)

    enc_output = jax.random.normal(k_enc, (B, S, D_in), dtype=jnp.float32)

    # Deterministic xavier_normal_-style init for the linear weight, zero bias.
    xavier_std = float(np.sqrt(2.0 / (D_in + D_out)))
    weight_t = jax.random.normal(k_w, (D_in, D_out), dtype=jnp.float32) * xavier_std
    bias = jnp.zeros((D_out,), dtype=jnp.float32)

    # Synthetic CLS / last-SEP positions. Batch 1 exercises the idx2 == idx1
    # corner case (sum to end of sequence); batch 3 has a single sentence.
    cls_pos = [[0, 5, 10], [0, 8], [0, 3, 6, 12], [0]]
    last_sep = [15, 7, 14, 9]

    starts_np, ends_np = build_segment_tables(cls_pos, last_sep, max_num_sent, S)
    starts = jnp.asarray(starts_np)
    ends = jnp.asarray(ends_np)

    ref = _reference(np.asarray(enc_output), np.asarray(weight_t),
                     np.asarray(bias), starts_np, ends_np)

    # f32 path: tight check against the torch-order reference (the kernel uses
    # the mathematically identical sum-then-project association).
    out_f32 = dialog_act_labeller(enc_output, weight_t, bias, starts, ends,
                                  compute_dtype=jnp.float32)
    out_f32 = jax.block_until_ready(out_f32)
    np.testing.assert_allclose(np.asarray(out_f32), ref, rtol=1e-4, atol=1e-4)

    # bf16 MXU-feed path (bf16 inputs, f32 accumulation): loose sanity check.
    out_bf16 = dialog_act_labeller(enc_output, weight_t, bias, starts, ends,
                                   compute_dtype=jnp.bfloat16)
    out_bf16 = jax.block_until_ready(out_bf16)
    np.testing.assert_allclose(np.asarray(out_bf16), ref, rtol=1e-1, atol=2e-1)

    print("KERNEL_OK")
</pallas_src>

<mosaic_0001>
module attributes {stable_mosaic.version = 11 : i64} {
  func.func @_dialog_act_kernel(%arg0: i32, %arg1: memref<2x16x32xf32, #tpu.memory_space<vmem>>, %arg2: memref<32x128xf32, #tpu.memory_space<vmem>>, %arg3: memref<1x128xf32, #tpu.memory_space<vmem>>, %arg4: memref<2x4x1xi32, #tpu.memory_space<vmem>>, %arg5: memref<2x4x1xi32, #tpu.memory_space<vmem>>, %arg6: memref<2x4x128xf32, #tpu.memory_space<vmem>>) attributes {dimension_semantics = [#tpu.dimension_semantics<parallel>], iteration_bounds = array<i64: 2>, scalar_prefetch = 0 : i64, scratch_operands = 0 : i64, tpu.core_type = #tpu.core_type<tc>, window_params = [{transform_indices = @transform_0, window_bounds = array<i64: 2, 16, 32>}, {pipeline_mode = #tpu.pipeline_mode<synchronous>, transform_indices = @transform_1, window_bounds = array<i64: 32, 128>}, {pipeline_mode = #tpu.pipeline_mode<synchronous>, transform_indices = @transform_2, window_bounds = array<i64: 1, 128>}, {transform_indices = @transform_3, window_bounds = array<i64: 2, 4, 1>}, {transform_indices = @transform_4, window_bounds = array<i64: 2, 4, 1>}, {transform_indices = @transform_5, window_bounds = array<i64: 2, 4, 128>}]} {
    %c0 = arith.constant 0 : index
    %c0_0 = arith.constant 0 : index
    %c0_1 = arith.constant 0 : index
    %0 = vector.load %arg1[%c0, %c0_0, %c0_1] : memref<2x16x32xf32, #tpu.memory_space<vmem>>, vector<2x16x32xf32>
    %c0_2 = arith.constant 0 : index
    %c0_3 = arith.constant 0 : index
    %1 = vector.load %arg2[%c0_2, %c0_3] : memref<32x128xf32, #tpu.memory_space<vmem>>, vector<32x128xf32>
    %c0_4 = arith.constant 0 : index
    %c0_5 = arith.constant 0 : index
    %2 = vector.load %arg3[%c0_4, %c0_5] : memref<1x128xf32, #tpu.memory_space<vmem>>, vector<1x128xf32>
    %c0_6 = arith.constant 0 : index
    %c0_7 = arith.constant 0 : index
    %c0_8 = arith.constant 0 : index
    %3 = vector.load %arg4[%c0_6, %c0_7, %c0_8] : memref<2x4x1xi32, #tpu.memory_space<vmem>>, vector<2x4x1xi32>
    %c0_9 = arith.constant 0 : index
    %c0_10 = arith.constant 0 : index
    %c0_11 = arith.constant 0 : index
    %4 = vector.load %arg5[%c0_9, %c0_10, %c0_11] : memref<2x4x1xi32, #tpu.memory_space<vmem>>, vector<2x4x1xi32>
    %5 = tpu.iota {dimensions = array<i32: 2>} : vector<2x4x16xi32>
    %6 = vector.broadcast %3 : vector<2x4x1xi32> to vector<2x4x16xi32>
    %7 = arith.cmpi sge, %5, %6 : vector<2x4x16xi32>
    %8 = vector.broadcast %4 : vector<2x4x1xi32> to vector<2x4x16xi32>
    %9 = arith.cmpi slt, %5, %8 : vector<2x4x16xi32>
    %10 = arith.andi %7, %9 : vector<2x4x16xi1>
    %11 = arith.extui %10 : vector<2x4x16xi1> to vector<2x4x16xi32>
    %12 = arith.sitofp %11 : vector<2x4x16xi32> to vector<2x4x16xf32>
    "tpu.trace_start"() <{level = 10 : i32, message = "bms,bsd->bmd"}> : () -> ()
    %cst = arith.constant dense<0.000000e+00> : vector<2x4x32xf32>
    %13 = tpu.matmul %12, %0, %cst {dimension_numbers = #tpu.dot_dimension_numbers<[2], [1], [1], [2], [0, 0, 0, 1, 1, 2], [0], [0]>} : vector<2x4x16xf32>, vector<2x16x32xf32>, vector<2x4x32xf32> -> vector<2x4x32xf32>
    "tpu.trace_stop"() : () -> ()
    %14 = arith.subi %4, %3 : vector<2x4x1xi32>
    %15 = arith.sitofp %14 : vector<2x4x1xi32> to vector<2x4x1xf32>
    %16 = vector.shape_cast %13 : vector<2x4x32xf32> to vector<8x32xf32>
    %cst_12 = arith.constant dense<0.000000e+00> : vector<8x128xf32>
    %17 = tpu.matmul %16, %1, %cst_12 {dimension_numbers = #tpu.dot_dimension_numbers<[1], [0], [0], [1], [0, 0, 1, 1], [], []>} : vector<8x32xf32>, vector<32x128xf32>, vector<8x128xf32> -> vector<8x128xf32>
    %18 = vector.shape_cast %17 : vector<8x128xf32> to vector<2x4x128xf32>
    %19 = vector.shape_cast %2 : vector<1x128xf32> to vector<1x1x128xf32>
    %20 = vector.broadcast %15 : vector<2x4x1xf32> to vector<2x4x128xf32>
    %21 = vector.broadcast %19 : vector<1x1x128xf32> to vector<2x4x128xf32>
    %22 = arith.mulf %20, %21 : vector<2x4x128xf32>
    %23 = arith.addf %18, %22 : vector<2x4x128xf32>
    %24 = tpu.iota {dimensions = array<i32: 2>} : vector<2x4x128xi32>
    %c8_i32 = arith.constant 8 : i32
    %25 = vector.broadcast %c8_i32 : i32 to vector<2x4x128xi32>
    %26 = arith.cmpi slt, %24, %25 : vector<2x4x128xi32>
    %cst_13 = arith.constant -1.000000e+30 : f32
    %27 = vector.broadcast %cst_13 : f32 to vector<2x4x128xf32>
    %28 = arith.select %26, %23, %27 : vector<2x4x128xi1>, vector<2x4x128xf32>
    %cst_14 = arith.constant dense<0xFF800000> : vector<2x4xf32>
    %29 = vector.multi_reduction <maximumf>, %28, %cst_14 [2] : vector<2x4x128xf32> to vector<2x4xf32>
    %30 = vector.shape_cast %29 : vector<2x4xf32> to vector<2x4x1xf32>
    %31 = vector.broadcast %30 : vector<2x4x1xf32> to vector<2x4x128xf32>
    %32 = arith.subf %28, %31 : vector<2x4x128xf32>
    %33 = math.exp %32 : vector<2x4x128xf32>
    %cst_15 = arith.constant dense<0.000000e+00> : vector<2x4xf32>
    %34 = vector.multi_reduction <add>, %33, %cst_15 [2] : vector<2x4x128xf32> to vector<2x4xf32>
    %35 = vector.shape_cast %34 : vector<2x4xf32> to vector<2x4x1xf32>
    %36 = math.log %35 : vector<2x4x1xf32>
    %37 = vector.broadcast %36 : vector<2x4x1xf32> to vector<2x4x128xf32>
    %38 = arith.subf %32, %37 : vector<2x4x128xf32>
    %c0_16 = arith.constant 0 : index
    %c0_17 = arith.constant 0 : index
    %c0_18 = arith.constant 0 : index
    %39 = vector.load %arg6[%c0_16, %c0_17, %c0_18] : memref<2x4x128xf32, #tpu.memory_space<vmem>>, vector<2x4x128xf32>
    tpu.vector_store %arg6[%c0_16, %c0_17, %c0_18], %38 {strides = array<i32>} : memref<2x4x128xf32, #tpu.memory_space<vmem>>, vector<2x4x128xf32>,
    return
  }
  func.func @transform_0(%arg0: i32) -> (i32, i32, i32) {
    %c0_i32 = arith.constant 0 : i32
    %c0_i32_0 = arith.constant 0 : i32
    %c0_i32_1 = arith.constant 0 : i32
    return %arg0, %c0_i32, %c0_i32_0 : i32, i32, i32
  }
  func.func @transform_1(%arg0: i32) -> (i32, i32) {
    %c0_i32 = arith.constant 0 : i32
    %c0_i32_0 = arith.constant 0 : i32
    %c0_i32_1 = arith.constant 0 : i32
    return %c0_i32, %c0_i32_0 : i32, i32
  }
  func.func @transform_2(%arg0: i32) -> (i32, i32) {
    %c0_i32 = arith.constant 0 : i32
    %c0_i32_0 = arith.constant 0 : i32
    %c0_i32_1 = arith.constant 0 : i32
    return %c0_i32, %c0_i32_0 : i32, i32
  }
  func.func @transform_3(%arg0: i32) -> (i32, i32, i32) {
    %c0_i32 = arith.constant 0 : i32
    %c0_i32_0 = arith.constant 0 : i32
    %c0_i32_1 = arith.constant 0 : i32
    return %arg0, %c0_i32, %c0_i32_0 : i32, i32, i32
  }
  func.func @transform_4(%arg0: i32) -> (i32, i32, i32) {
    %c0_i32 = arith.constant 0 : i32
    %c0_i32_0 = arith.constant 0 : i32
    %c0_i32_1 = arith.constant 0 : i32
    return %arg0, %c0_i32, %c0_i32_0 : i32, i32, i32
  }
  func.func @transform_5(%arg0: i32) -> (i32, i32, i32) {
    %c0_i32 = arith.constant 0 : i32
    %c0_i32_0 = arith.constant 0 : i32
    %c0_i32_1 = arith.constant 0 : i32
    return %arg0, %c0_i32, %c0_i32_0 : i32, i32, i32
  }
}

</mosaic_0001>

<llo_original>
// kernel: tpu_custom_call.1
$region0: #{tpu_custom_call.1}
  #allocation0 [shape = 'u32[]', space=smem, size = 0x4, offset = 0x4, fixed_abs, tag = 'smem constant byte address 0x4 - core index']
  #allocation1 [shape = 'u32[144,128]{1,0:T(1,128)}', space=vmem, size = 0x12000, scoped, tag = 'internal scratch']
  %s0 = inlined_call_operand.hbm [shape: f32[4,16,32], index: 0, kind: input, shape index: {}]
  %s1 = inlined_call_operand.vmem [shape: f32[32,128], index: 1, kind: input, shape index: {}]
  %s2 = inlined_call_operand.vmem [shape: f32[1,128], index: 2, kind: input, shape index: {}]
  %s3 = inlined_call_operand.vmem [shape: s32[4,4,1], index: 3, kind: input, shape index: {}]
  %s4 = inlined_call_operand.vmem [shape: s32[4,4,1], index: 4, kind: input, shape index: {}]
  %s5 = inlined_call_operand.hbm [shape: f32[4,4,128], index: 5, kind: output, shape index: {}]
  %s6 = sld [smem:[#allocation0]]
  $region57: #{tpu_custom_call.1} parent=0
    _
  %s8 = ssub.s32 1, %s6
  %s9 = scalar_select 0, %s8, %s6
  $region1: #{tpu_custom_call.1} parent=0
    #allocation2 [shape = 'u8[32768]{0}', space=vmem, size = 0x8000, scoped, tag = 'input window, operand 0']
    #allocation3 [shape = 's32[2]{0}', space=sflag, size = 0x8, scoped, tag = 'scoped memory for tpu_custom_call.1']
    #allocation4 [shape = 's32[2]{0}', space=sflag, size = 0x8, scoped, tag = 'scoped memory for tpu_custom_call.1']
    #allocation5 [shape = 'u8[8192]{0}', space=vmem, size = 0x2000, scoped, tag = 'output window, operand 0']
    %10 = vsyncpa [#allocation3], 0
    %s11 = scalar_lea.sflag [#allocation3], 1
    %12 = vsyncpa %s11, 0
    %13 = vsyncpa [#allocation4], 0
    %s14 = scalar_lea.sflag [#allocation4], 1
    %15 = vsyncpa %s14, 0
    loop: start=0, step=1, limit=4
    $region2: #{tpu_custom_call.1} parent=1 // loop_pre_header
      _
    $region3: #{tpu_custom_call.1} parent=1 // loop_header
      %s17 = sphi 0, %s21
      %p18 = scmp.ge.s32.totalorder %s17, 4
      %s27 = sphi 0, %s29
      %s30 = sphi 0, %s27
      %s31 = sphi 0, %s30
      %s47 = sphi 0, %s31
      %s51 = sphi 0, %s51
      %s53 = sphi 0, %s51
      %s54 = sphi 0, %s53
      %s68 = sphi 0, %s54
      %s72 = sphi 0, %s72
      %s74 = sphi 0, %s72
      %s75 = sphi 0, %s74
      %s89 = sphi 0, %s75
      %s95 = sphi 0, %s97
      %s98 = sphi 0, %s95
      %s99 = sphi 0, %s98
      %s115 = sphi 0, %s99
      %s121 = sphi 0, %s123
      %s124 = sphi 0, %s121
      %s125 = sphi 0, %s124
      %s141 = sphi 0, %s125
      %s147 = sphi 0, %s149
      %s150 = sphi 0, %s147
      %s151 = sphi 0, %s150
      %s167 = sphi 0, %s151
    $region4: #{tpu_custom_call.1} parent=1 // loop_header_branch
      %20 = sbr.rel (%p18) target = $region8
    $region5: #{tpu_custom_call.1} parent=1 // loop_body
      %s22 = ssub.s32 %s17, 1
      %s23 = ssub.s32 %s17, 2
      %s24 = sadd.s32 %s17, 1
      %s25 = ssub.s32 %s17, %s24
      %p26 = scmp.eq.s32.totalorder %s25, 0
      %s28 = sadd.s32 %s27, 1
      %s29 = scalar_select %p26, %s27, %s28
      %p32 = pneg %p26
      %p33 = scmp.eq.s32.totalorder %s17, 1
      %p34 = por %p32, %p33
      %p35 = scmp.ne.s32.totalorder %s27, %s30
      %p36 = scmp.eq.s32.totalorder %s17, 0
      %p37 = por %p35, %p36
      %p38 = scmp.ne.s32.totalorder %s27, %s30
      %p39 = scmp.eq.s32.totalorder %s22, 1
      %p40 = por %p38, %p39
      %p41 = scmp.ne.s32.totalorder %s30, %s31
      %p42 = scmp.eq.s32.totalorder %s22, 0
      %p43 = por %p41, %p42
      %p44 = scmp.ne.s32.totalorder %s30, %s31
      %p45 = scmp.eq.s32.totalorder %s23, 1
      %p46 = por %p44, %p45
      %p48 = scmp.ne.s32.totalorder %s31, %s47
      %p49 = scmp.eq.s32.totalorder %s23, 0
      %p50 = por %p48, %p49
      %s52 = sadd.s32 %s51, 1
      %p55 = scmp.eq.s32.totalorder %s17, 1
      %p56 = scmp.ne.s32.totalorder %s51, %s53
      %p57 = scmp.eq.s32.totalorder %s17, 0
      %p58 = por %p56, %p57
      %p59 = scmp.ne.s32.totalorder %s51, %s53
      %p60 = scmp.eq.s32.totalorder %s22, 1
      %p61 = por %p59, %p60
      %p62 = scmp.ne.s32.totalorder %s53, %s54
      %p63 = scmp.eq.s32.totalorder %s22, 0
      %p64 = por %p62, %p63
      %p65 = scmp.ne.s32.totalorder %s53, %s54
      %p66 = scmp.eq.s32.totalorder %s23, 1
      %p67 = por %p65, %p66
      %p69 = scmp.ne.s32.totalorder %s54, %s68
      %p70 = scmp.eq.s32.totalorder %s23, 0
      %p71 = por %p69, %p70
      %s73 = sadd.s32 %s72, 1
      %p76 = scmp.eq.s32.totalorder %s17, 1
      %p77 = scmp.ne.s32.totalorder %s72, %s74
      %p78 = scmp.eq.s32.totalorder %s17, 0
      %p79 = por %p77, %p78
      %p80 = scmp.ne.s32.totalorder %s72, %s74
      %p81 = scmp.eq.s32.totalorder %s22, 1
      %p82 = por %p80, %p81
      %p83 = scmp.ne.s32.totalorder %s74, %s75
      %p84 = scmp.eq.s32.totalorder %s22, 0
      %p85 = por %p83, %p84
      %p86 = scmp.ne.s32.totalorder %s74, %s75
      %p87 = scmp.eq.s32.totalorder %s23, 1
      %p88 = por %p86, %p87
      %p90 = scmp.ne.s32.totalorder %s75, %s89
      %p91 = scmp.eq.s32.totalorder %s23, 0
      %p92 = por %p90, %p91
      %s93 = ssub.s32 %s17, %s24
      %p94 = scmp.eq.s32.totalorder %s93, 0
      %s96 = sadd.s32 %s95, 1
      %s97 = scalar_select %p94, %s95, %s96
      %p100 = pneg %p94
      %p101 = scmp.eq.s32.totalorder %s17, 1
      %p102 = por %p100, %p101
      %p103 = scmp.ne.s32.totalorder %s95, %s98
      %p104 = scmp.eq.s32.totalorder %s17, 0
      %p105 = por %p103, %p104
      %p106 = scmp.ne.s32.totalorder %s95, %s98
      %p107 = scmp.eq.s32.totalorder %s22, 1
      %p108 = por %p106, %p107
      %p109 = scmp.ne.s32.totalorder %s98, %s99
      %p110 = scmp.eq.s32.totalorder %s22, 0
      %p111 = por %p109, %p110
      %p112 = scmp.ne.s32.totalorder %s98, %s99
      %p113 = scmp.eq.s32.totalorder %s23, 1
      %p114 = por %p112, %p113
      %p116 = scmp.ne.s32.totalorder %s99, %s115
      %p117 = scmp.eq.s32.totalorder %s23, 0
      %p118 = por %p116, %p117
      %s119 = ssub.s32 %s17, %s24
      %p120 = scmp.eq.s32.totalorder %s119, 0
      %s122 = sadd.s32 %s121, 1
      %s123 = scalar_select %p120, %s121, %s122
      %p126 = pneg %p120
      %p127 = scmp.eq.s32.totalorder %s17, 1
      %p128 = por %p126, %p127
      %p129 = scmp.ne.s32.totalorder %s121, %s124
      %p130 = scmp.eq.s32.totalorder %s17, 0
      %p131 = por %p129, %p130
      %p132 = scmp.ne.s32.totalorder %s121, %s124
      %p133 = scmp.eq.s32.totalorder %s22, 1
      %p134 = por %p132, %p133
      %p135 = scmp.ne.s32.totalorder %s124, %s125
      %p136 = scmp.eq.s32.totalorder %s22, 0
      %p137 = por %p135, %p136
      %p138 = scmp.ne.s32.totalorder %s124, %s125
      %p139 = scmp.eq.s32.totalorder %s23, 1
      %p140 = por %p138, %p139
      %p142 = scmp.ne.s32.totalorder %s125, %s141
      %p143 = scmp.eq.s32.totalorder %s23, 0
      %p144 = por %p142, %p143
      %s145 = ssub.s32 %s17, %s24
      %p146 = scmp.eq.s32.totalorder %s145, 0
      %s148 = sadd.s32 %s147, 1
      %s149 = scalar_select %p146, %s147, %s148
      %p152 = pneg %p146
      %p153 = scmp.eq.s32.totalorder %s17, 1
      %p154 = por %p152, %p153
      %p155 = scmp.ne.s32.totalorder %s147, %s150
      %p156 = scmp.eq.s32.totalorder %s17, 0
      %p157 = por %p155, %p156
      %p158 = scmp.ne.s32.totalorder %s147, %s150
      %p159 = scmp.eq.s32.totalorder %s22, 1
      %p160 = por %p158, %p159
      %p161 = scmp.ne.s32.totalorder %s150, %s151
      %p162 = scmp.eq.s32.totalorder %s22, 0
      %p163 = por %p161, %p162
      %p164 = scmp.ne.s32.totalorder %s150, %s151
      %p165 = scmp.eq.s32.totalorder %s23, 1
      %p166 = por %p164, %p165
      %p168 = scmp.ne.s32.totalorder %s151, %s167
      %p169 = scmp.eq.s32.totalorder %s23, 0
      %p170 = por %p168, %p169
      %p171 = scmp.le.s32.totalorder 1, %s17
      %p172 = scmp.lt.s32.totalorder %s17, 3
      %p173 = pnand %p171, %p172
      %p174 = pneg %p173
      // Predicated region
      $region9: #{tpu_custom_call.1} parent=5 // pred_check
        _
      $region10: #{tpu_custom_call.1} parent=5 // pred_check_branch
        %176 = sbr.rel (%p173) target = $region12
      $region11: #{tpu_custom_call.1} parent=5 // pred_region
        %s177 = ssub.s32 %s17, 1
        // Predicated region
        $region13: #{tpu_custom_call.1} parent=11 // pred_check
          %p178 = pneg %p64
        $region14: #{tpu_custom_call.1} parent=11 // pred_check_branch
          %180 = sbr.rel (%p178) target = $region16
        $region15: #{tpu_custom_call.1} parent=11 // pred_region
          _
        $region16: #{tpu_custom_call.1} parent=11 // pred_fallthru
          _
        // Predicated region
        $region17: #{tpu_custom_call.1} parent=11 // pred_check
          %p181 = pneg %p85
        $region18: #{tpu_custom_call.1} parent=11 // pred_check_branch
          %183 = sbr.rel (%p181) target = $region20
        $region19: #{tpu_custom_call.1} parent=11 // pred_region
          _
        $region20: #{tpu_custom_call.1} parent=11 // pred_fallthru
          _
      $region12: #{tpu_custom_call.1} parent=5 // pred_fallthru
        _
      %p184 = scmp.lt.s32.totalorder %s17, 2
      // Predicated region
      $region21: #{tpu_custom_call.1} parent=5 // pred_check
        %p185 = pneg %p184
      $region22: #{tpu_custom_call.1} parent=5 // pred_check_branch
        %187 = sbr.rel (%p185) target = $region24
      $region23: #{tpu_custom_call.1} parent=5 // pred_region
        // Predicated region
        $region25: #{tpu_custom_call.1} parent=23 // pred_check
          %p188 = pneg %p37
        $region26: #{tpu_custom_call.1} parent=23 // pred_check_branch
          %190 = sbr.rel (%p188) target = $region28
        $region27: #{tpu_custom_call.1} parent=23 // pred_region
          %s191 = sand.u32 %s27, 1
          %s192 = scalar_lea.sflag [#allocation3], %s191
          %s193 = sand.u32 %s27, 1
          %s194 = smul.addr %s193, 32
          %s195 = scalar_lea.vmem [#allocation2], %s194
          %s196 = smul.u32 2, %s17
          %s198 = ssub.s32 512, 512
          %199 = vsyncadd %s192, %s198
          %s200 = smul.addr %s196, 2
          %s201 = smul.addr %s200, 128
          %s202 = scalar_lea.hbm %s0, %s201
          %s203 = sshll.u32 %s195, 4
          %s204 = int_to_ptr.vmem [resolvable:$true] %s203
          %209 = dma.hbm_to_vmem [thread:$0]  %s202, 512, %s204, %s192, 128, 128, 8
        $region28: #{tpu_custom_call.1} parent=23 // pred_fallthru
          _
        // Predicated region
        $region29: #{tpu_custom_call.1} parent=23 // pred_check
          %p210 = pneg %p105
        $region30: #{tpu_custom_call.1} parent=23 // pred_check_branch
          %212 = sbr.rel (%p210) target = $region32
        $region31: #{tpu_custom_call.1} parent=23 // pred_region
          %s213 = smul.u32 2, %s17
          %p214 = scmp.lt.s32.totalorder %s213, 3
          %s215 = scalar_select %p214, %s213, 3
          %s216 = smul.addr %s215, 4
          %s217 = scalar_lea.vmem %s3, %s216
          %s218 = smul.u32 2, %s17
        $region32: #{tpu_custom_call.1} parent=23 // pred_fallthru
          _
        // Predicated region
        $region33: #{tpu_custom_call.1} parent=23 // pred_check
          %p219 = pneg %p131
        $region34: #{tpu_custom_call.1} parent=23 // pred_check_branch
          %221 = sbr.rel (%p219) target = $region36
        $region35: #{tpu_custom_call.1} parent=23 // pred_region
          %s222 = smul.u32 2, %s17
          %p223 = scmp.lt.s32.totalorder %s222, 3
          %s224 = scalar_select %p223, %s222, 3
          %s225 = smul.addr %s224, 4
          %s226 = scalar_lea.vmem %s4, %s225
          %s227 = smul.u32 2, %s17
        $region36: #{tpu_custom_call.1} parent=23 // pred_fallthru
          _
      $region24: #{tpu_custom_call.1} parent=5 // pred_fallthru
        _
      %p228 = scmp.le.s32.totalorder 1, %s17
      %p229 = scmp.lt.s32.totalorder %s17, 3
      %p230 = pnand %p228, %p229
      %p231 = pneg %p230
      // Predicated region
      $region37: #{tpu_custom_call.1} parent=5 // pred_check
        _
      $region38: #{tpu_custom_call.1} parent=5 // pred_check_branch
        %233 = sbr.rel (%p230) target = $region40
      $region39: #{tpu_custom_call.1} parent=5 // pred_region
        %s234 = ssub.s32 %s17, 1
        %s235 = sand.u32 %s30, 1
        %s236 = scalar_lea.sflag [#allocation3], %s235
        %s237 = sand.u32 %s30, 1
        %s238 = smul.addr %s237, 32
        %s239 = scalar_lea.vmem [#allocation2], %s238
        // Predicated region
        $region41: #{tpu_custom_call.1} parent=39 // pred_check
          %p240 = pneg %p43
        $region42: #{tpu_custom_call.1} parent=39 // pred_check_branch
          %242 = sbr.rel (%p240) target = $region44
        $region43: #{tpu_custom_call.1} parent=39 // pred_region
          %243 = dma.done %s236, 512
        $region44: #{tpu_custom_call.1} parent=39 // pred_fallthru
          _
        %s244 = sand.u32 %s30, 1
        %s245 = scalar_lea.sflag [#allocation3], %s244
        %s246 = sand.u32 %s30, 1
        %s247 = smul.addr %s246, 32
        %s248 = scalar_lea.vmem [#allocation2], %s247
        %p249 = pneg %p43
        %p250 = pneg %p40
        %p251 = pneg %p64
        %p252 = pneg %p61
        %p253 = pneg %p85
        %p254 = pneg %p82
        %s255 = smul.u32 2, %s22
        %p256 = scmp.lt.s32.totalorder %s255, 3
        %s257 = scalar_select %p256, %s255, 3
        %s258 = smul.addr %s257, 4
        %s259 = scalar_lea.vmem %s3, %s258
        %p260 = pneg %p111
        %p261 = pneg %p108
        %s262 = smul.u32 2, %s22
        %p263 = scmp.lt.s32.totalorder %s262, 3
        %s264 = scalar_select %p263, %s262, 3
        %s265 = smul.addr %s264, 4
        %s266 = scalar_lea.vmem %s4, %s265
        %p267 = pneg %p137
        %p268 = pneg %p134
        %p269 = pneg %p163
        %p270 = pneg %p160
        %s271 = sand.u32 %s150, 1
        %s272 = scalar_lea.sflag [#allocation4], %s271
        %s273 = sand.u32 %s150, 1
        %s274 = smul.addr %s273, 8
        %s275 = scalar_lea.vmem [#allocation5], %s274
        %s276 = smul.u32 2, %s22
        %s277 = smul.u32 2, %s22
        %p278 = scmp.lt.s32.totalorder %s277, 3
        %s279 = scalar_select %p278, %s277, 3
        %s280 = smul.addr %s279, 4
        %s281 = scalar_lea.vmem %s3, %s280
        %s282 = smul.u32 2, %s22
        %s283 = smul.u32 2, %s22
        %p284 = scmp.lt.s32.totalorder %s283, 3
        %s285 = scalar_select %p284, %s283, 3
        %s286 = smul.addr %s285, 4
        %s287 = scalar_lea.vmem %s4, %s286
        %s288 = smul.u32 2, %s22
        %s289 = smul.u32 2, %s22
        %v290 = vld [vmem:[%s239] sm:$0xff]
        %v291 = vld [vmem:[%s239 + $0x8] sm:$0xff]
        %v292 = vld [vmem:[%s239 + $0x10] sm:$0xff]
        %v293 = vld [vmem:[%s239 + $0x18] sm:$0xff]
        %v294 = vld [vmem:[%s1] sm:$0xff]
        %v295 = vld [vmem:[%s1 + $0x8] sm:$0xff]
        %v296 = vld [vmem:[%s1 + $0x10] sm:$0xff]
        %v297 = vld [vmem:[%s1 + $0x18] sm:$0xff]
        %v298 = vld [vmem:[%s2] sm:$0x1]
        %v299 = vld [vmem:[%s281] sm:$0xf]
        %v300 = vld [vmem:[%s281 + $0x4] sm:$0xf]
        %v301 = vld [vmem:[%s287] sm:$0xf]
        %v302 = vld [vmem:[%s287 + $0x4] sm:$0xf]
        %v303 = vlaneseq
        %v304 = vand.u32 %v303, 127
        %305 = vset.pattern.permute.xlu0 0
        %306 = vperm.xlu0 %305, %v299
        %v307 = vpop.permute.xlu0 %306
        %308 = vset.pattern.permute.xlu0 0
        %309 = vperm.xlu0 %308, %v300
        %v310 = vpop.permute.xlu0 %309
        %vm311 = vcmp.ge.s32.totalorder %v304, %v307
        %vm312 = vcmp.ge.s32.totalorder %v304, %v310
        %313 = vset.pattern.permute.xlu0 0
        %314 = vperm.xlu0 %313, %v301
        %v315 = vpop.permute.xlu0 %314
        %316 = vset.pattern.permute.xlu0 0
        %317 = vperm.xlu0 %316, %v302
        %v318 = vpop.permute.xlu0 %317
        %vm319 = vcmp.lt.s32.totalorder %v304, %v315
        %vm320 = vcmp.lt.s32.totalorder %v304, %v318
        %vm321 = vmand %vm311, %vm319
        %vm322 = vmand %vm312, %vm320
        %v323 = vsel %vm321, 1, 0
        %v324 = vsel %vm322, 1, 0
        %v325 = vcvt.s32.f32 %v323
        %v326 = vcvt.s32.f32 %v324
        %vm327 = vcmask 130048
        %v329 = vsel %vm327, %v325, 0
        %331 = vmatprep.subr.mxu0 0.0
        %332 = vmatpush1.msra.mxu0 %v290
        %333 = vmatprep.subr.mxu0 0.0
        %334 = vmatpush1.msra.mxu0 %v291
        %335 = vmatprep.subr.mxu0 0.0
        %336 = vmatpush1.msra.mxu0 0.0
        %337 = vmatprep.subr.mxu0 0.0
        %338 = vmatpush1.msra.mxu0 0.0
        %339 = vmatprep.subr.mxu0 0.0
        %340 = vmatpush1.msra.mxu0 0.0
        %341 = vmatprep.subr.mxu0 0.0
        %342 = vmatpush1.msra.mxu0 0.0
        %343 = vmatprep.subr.mxu0 0.0
        %344 = vmatpush1.msra.mxu0 0.0
        %345 = vmatprep.subr.mxu0 0.0
        %346 = vmatpush1.msra.mxu0 0.0
        %347 = vmatprep.subr.mxu0 0.0
        %348 = vmatpush1.msra.mxu0 0.0
        %349 = vmatprep.subr.mxu0 0.0
        %350 = vmatpush1.msra.mxu0 0.0
        %351 = vmatprep.subr.mxu0 0.0
        %352 = vmatpush1.msra.mxu0 0.0
        %353 = vmatprep.subr.mxu0 0.0
        %354 = vmatpush1.msra.mxu0 0.0
        %355 = vmatprep.subr.mxu0 0.0
        %356 = vmatpush1.msra.mxu0 0.0
        %357 = vmatprep.subr.mxu0 0.0
        %358 = vmatpush1.msra.mxu0 0.0
        %359 = vmatprep.subr.mxu0 0.0
        %360 = vmatpush1.msra.mxu0 0.0
        %361 = vmatprep.subr.mxu0 0.0
        %362 = vmatpush1.msra.mxu0 0.0
        %363 = vmatprep.subr.mxu0 0.0
        %364 = vmatpush1.msra.mxu0 0.0
        %365 = vmatprep.subr.mxu0 0.0
        %366 = vmatpush1.msra.mxu0 0.0
        %367 = vmatprep.subr.mxu0 0.0
        %368 = vmatpush1.msra.mxu0 0.0
        %369 = vmatprep.subr.mxu0 0.0
        %370 = vmatpush1.msra.mxu0 0.0
        %371 = vmatprep.subr.mxu0 0.0
        %372 = vmatpush1.msra.mxu0 0.0
        %373 = vmatprep.subr.mxu0 0.0
        %374 = vmatpush1.msra.mxu0 0.0
        %375 = vmatprep.subr.mxu0 0.0
        %376 = vmatpush1.msra.mxu0 0.0
        %377 = vmatprep.subr.mxu0 0.0
        %378 = vmatpush1.msra.mxu0 0.0
        %379 = vmatprep.subr.mxu0 0.0
        %380 = vmatpush1.msra.mxu0 0.0
        %381 = vmatprep.subr.mxu0 0.0
        %382 = vmatpush1.msra.mxu0 0.0
        %383 = vmatprep.subr.mxu0 0.0
        %384 = vmatpush1.msra.mxu0 0.0
        %385 = vmatprep.subr.mxu0 0.0
        %386 = vmatpush1.msra.mxu0 0.0
        %387 = vmatprep.subr.mxu0 0.0
        %388 = vmatpush1.msra.mxu0 0.0
        %389 = vmatprep.subr.mxu0 0.0
        %390 = vmatpush1.msra.mxu0 0.0
        %391 = vmatprep.subr.mxu0 0.0
        %392 = vmatpush1.msra.mxu0 0.0
        %393 = vmatprep.subr.mxu0 0.0
        %394 = vmatpush1.msra.mxu0 0.0
        %395 = vmatprep.mubr.f32.mxu0 0.0
        %396 = vmatmul.mubr.f32.gmra.mrb[0].mxu0 %v329
        %v397 = vpop.f32.mrb[0].mxu0
        %v398 = vadd.f32 0.0, %v397
        %v399 = vpop.f32.mrb[0].mxu0
        %400 = vdwg.mxu0
        %v402 = vsel %vm327, %v326, 0
        %404 = vmatprep.subr.mxu0 0.0
        %405 = vmatpush1.msra.mxu0 %v292
        %406 = vmatprep.subr.mxu0 0.0
        %407 = vmatpush1.msra.mxu0 %v293
        %408 = vmatprep.subr.mxu0 0.0
        %409 = vmatpush1.msra.mxu0 0.0
        %410 = vmatprep.subr.mxu0 0.0
        %411 = vmatpush1.msra.mxu0 0.0
        %412 = vmatprep.subr.mxu0 0.0
        %413 = vmatpush1.msra.mxu0 0.0
        %414 = vmatprep.subr.mxu0 0.0
        %415 = vmatpush1.msra.mxu0 0.0
        %416 = vmatprep.subr.mxu0 0.0
        %417 = vmatpush1.msra.mxu0 0.0
        %418 = vmatprep.subr.mxu0 0.0
        %419 = vmatpush1.msra.mxu0 0.0
        %420 = vmatprep.subr.mxu0 0.0
        %421 = vmatpush1.msra.mxu0 0.0
        %422 = vmatprep.subr.mxu0 0.0
        %423 = vmatpush1.msra.mxu0 0.0
        %424 = vmatprep.subr.mxu0 0.0
        %425 = vmatpush1.msra.mxu0 0.0
        %426 = vmatprep.subr.mxu0 0.0
        %427 = vmatpush1.msra.mxu0 0.0
        %428 = vmatprep.subr.mxu0 0.0
        %429 = vmatpush1.msra.mxu0 0.0
        %430 = vmatprep.subr.mxu0 0.0
        %431 = vmatpush1.msra.mxu0 0.0
        %432 = vmatprep.subr.mxu0 0.0
        %433 = vmatpush1.msra.mxu0 0.0
        %434 = vmatprep.subr.mxu0 0.0
        %435 = vmatpush1.msra.mxu0 0.0
        %436 = vmatprep.subr.mxu0 0.0
        %437 = vmatpush1.msra.mxu0 0.0
        %438 = vmatprep.subr.mxu0 0.0
        %439 = vmatpush1.msra.mxu0 0.0
        %440 = vmatprep.subr.mxu0 0.0
        %441 = vmatpush1.msra.mxu0 0.0
        %442 = vmatprep.subr.mxu0 0.0
        %443 = vmatpush1.msra.mxu0 0.0
        %444 = vmatprep.subr.mxu0 0.0
        %445 = vmatpush1.msra.mxu0 0.0
        %446 = vmatprep.subr.mxu0 0.0
        %447 = vmatpush1.msra.mxu0 0.0
        %448 = vmatprep.subr.mxu0 0.0
        %449 = vmatpush1.msra.mxu0 0.0
        %450 = vmatprep.subr.mxu0 0.0
        %451 = vmatpush1.msra.mxu0 0.0
        %452 = vmatprep.subr.mxu0 0.0
        %453 = vmatpush1.msra.mxu0 0.0
        %454 = vmatprep.subr.mxu0 0.0
        %455 = vmatpush1.msra.mxu0 0.0
        %456 = vmatprep.subr.mxu0 0.0
        %457 = vmatpush1.msra.mxu0 0.0
        %458 = vmatprep.subr.mxu0 0.0
        %459 = vmatpush1.msra.mxu0 0.0
        %460 = vmatprep.subr.mxu0 0.0
        %461 = vmatpush1.msra.mxu0 0.0
        %462 = vmatprep.subr.mxu0 0.0
        %463 = vmatpush1.msra.mxu0 0.0
        %464 = vmatprep.subr.mxu0 0.0
        %465 = vmatpush1.msra.mxu0 0.0
        %466 = vmatprep.subr.mxu0 0.0
        %467 = vmatpush1.msra.mxu0 0.0
        %468 = vmatprep.mubr.f32.mxu0 0.0
        %469 = vmatmul.mubr.f32.gmra.mrb[0].mxu0 %v402
        %v470 = vpop.f32.mrb[0].mxu0
        %v471 = vadd.f32 0.0, %v470
        %v472 = vpop.f32.mrb[0].mxu0
        %473 = vdwg.mxu0
        %v474 = vsub.s32 %v301, %v299
        %v475 = vsub.s32 %v302, %v300
        %v476 = vcvt.s32.f32 %v474
        %v477 = vcvt.s32.f32 %v475
        %v480 = vcombine.low %v398, %v471
        %vm481 = vcmask 261120
        %v482 = vsel %vm481, %v480, 0
        %484 = vmatprep.subr.mxu0 0.0
        %485 = vmatpush1.msra.mxu0 %v294
        %486 = vmatprep.subr.mxu0 0.0
        %487 = vmatpush1.msra.mxu0 %v295
        %488 = vmatprep.subr.mxu0 0.0
        %489 = vmatpush1.msra.mxu0 %v296
        %490 = vmatprep.subr.mxu0 0.0
        %491 = vmatpush1.msra.mxu0 %v297
        %492 = vmatprep.subr.mxu0 0.0
        %493 = vmatpush1.msra.mxu0 0.0
        %494 = vmatprep.subr.mxu0 0.0
        %495 = vmatpush1.msra.mxu0 0.0
        %496 = vmatprep.subr.mxu0 0.0
        %497 = vmatpush1.msra.mxu0 0.0
        %498 = vmatprep.subr.mxu0 0.0
        %499 = vmatpush1.msra.mxu0 0.0
        %500 = vmatprep.subr.mxu0 0.0
        %501 = vmatpush1.msra.mxu0 0.0
        %502 = vmatprep.subr.mxu0 0.0
        %503 = vmatpush1.msra.mxu0 0.0
        %504 = vmatprep.subr.mxu0 0.0
        %505 = vmatpush1.msra.mxu0 0.0
        %506 = vmatprep.subr.mxu0 0.0
        %507 = vmatpush1.msra.mxu0 0.0
        %508 = vmatprep.subr.mxu0 0.0
        %509 = vmatpush1.msra.mxu0 0.0
        %510 = vmatprep.subr.mxu0 0.0
        %511 = vmatpush1.msra.mxu0 0.0
        %512 = vmatprep.subr.mxu0 0.0
        %513 = vmatpush1.msra.mxu0 0.0
        %514 = vmatprep.subr.mxu0 0.0
        %515 = vmatpush1.msra.mxu0 0.0
        %516 = vmatprep.subr.mxu0 0.0
        %517 = vmatpush1.msra.mxu0 0.0
        %518 = vmatprep.subr.mxu0 0.0
        %519 = vmatpush1.msra.mxu0 0.0
        %520 = vmatprep.subr.mxu0 0.0
        %521 = vmatpush1.msra.mxu0 0.0
        %522 = vmatprep.subr.mxu0 0.0
        %523 = vmatpush1.msra.mxu0 0.0
        %524 = vmatprep.subr.mxu0 0.0
        %525 = vmatpush1.msra.mxu0 0.0
        %526 = vmatprep.subr.mxu0 0.0
        %527 = vmatpush1.msra.mxu0 0.0
        %528 = vmatprep.subr.mxu0 0.0
        %529 = vmatpush1.msra.mxu0 0.0
        %530 = vmatprep.subr.mxu0 0.0
        %531 = vmatpush1.msra.mxu0 0.0
        %532 = vmatprep.subr.mxu0 0.0
        %533 = vmatpush1.msra.mxu0 0.0
        %534 = vmatprep.subr.mxu0 0.0
        %535 = vmatpush1.msra.mxu0 0.0
        %536 = vmatprep.subr.mxu0 0.0
        %537 = vmatpush1.msra.mxu0 0.0
        %538 = vmatprep.subr.mxu0 0.0
        %539 = vmatpush1.msra.mxu0 0.0
        %540 = vmatprep.subr.mxu0 0.0
        %541 = vmatpush1.msra.mxu0 0.0
        %542 = vmatprep.subr.mxu0 0.0
        %543 = vmatpush1.msra.mxu0 0.0
        %544 = vmatprep.subr.mxu0 0.0
        %545 = vmatpush1.msra.mxu0 0.0
        %546 = vmatprep.subr.mxu0 0.0
        %547 = vmatpush1.msra.mxu0 0.0
        %548 = vmatprep.mubr.f32.mxu0 0.0
        %549 = vmatmul.mubr.f32.gmra.mrb[0].mxu0 %v482
        %v550 = vpop.f32.mrb[0].mxu0
        %v551 = vadd.f32 0.0, %v550
        %v552 = vpop.f32.mrb[0].mxu0
        %553 = vdwg.mxu0
        %v555 = vcombine.high %v551, %v551
        %558 = vset.pattern.permute.xlu0 0
        %559 = vperm.xlu0 %558, %v476
        %v560 = vpop.permute.xlu0 %559
        %563 = vset.pattern.permute.xlu0 0
        %564 = vperm.xlu0 %563, %v477
        %v565 = vpop.permute.xlu0 %564
        %v568 = vlaneseq
        %v569 = vshrl.u32 %v568, 7
        %v570 = vsub.s32 0, %v569
        %v571 = vrot.slane %v298, %v570
        %v573 = vmul.f32 %v560, %v571
        %v574 = vmul.f32 %v565, %v571
        %v575 = vadd.f32 %v551, %v573
        %v576 = vadd.f32 %v555, %v574
        %vm577 = vcmp.lt.s32.totalorder %v304, 8
        %v578 = vsel %vm577, %v575, -1e+30
        %v579 = vsel %vm577, %v576, -1e+30
        %vm580 = vcmask 1043456
        %v581 = vsel %vm580, %v578, -inf
        %582 = vmax.xlane.f32.xlu0 %v581
        %v583 = vpop.xlane.xlu0 %582
        %v584 = vsel %vm580, %v579, -inf
        %585 = vmax.xlane.f32.xlu0 %v584
        %v586 = vpop.xlane.xlu0 %585
        %v587 = vsub.f32 %v578, %v583
        %v588 = vsub.f32 %v579, %v586
        %v589 = vmul.f32 %v587, 1.442695
        %v590 = vpow.pop %v589
        %v591 = vmul.f32 %v588, 1.442695
        %v592 = vpow.pop %v591
        %v593 = vsel %vm580, %v590, 0.0
        %594 = vadd.xlane.f32.xlu0 %v593
        %v595 = vpop.xlane.xlu0 %594
        %v596 = vsel %vm580, %v592, 0.0
        %597 = vadd.xlane.f32.xlu0 %v596
        %v598 = vpop.xlane.xlu0 %597
        %v599 = vlog2.pop %v595
        %v600 = vmul.f32 %v599, 0.6931472
        %v601 = vlog2.pop %v598
        %v602 = vmul.f32 %v601, 0.6931472
        %v603 = vsub.f32 %v587, %v600
        %v604 = vsub.f32 %v588, %v602
        %605 = vst [vmem:[%s275] sm:$0xf] %v603
        %606 = vst [vmem:[%s275 + $0x4] sm:$0xf] %v604
        %s607 = sand.u32 %s150, 1
        %s608 = scalar_lea.sflag [#allocation4], %s607
        %s609 = sand.u32 %s150, 1
        %s610 = smul.addr %s609, 8
        %s611 = scalar_lea.vmem [#allocation5], %s610
        // Predicated region
        $region45: #{tpu_custom_call.1} parent=39 // pred_check
          %p612 = pneg %p160
        $region46: #{tpu_custom_call.1} parent=39 // pred_check_branch
          %614 = sbr.rel (%p612) target = $region48
        $region47: #{tpu_custom_call.1} parent=39 // pred_region
          %s615 = smul.u32 2, %s22
          %s617 = ssub.s32 128, 128
          %618 = vsyncadd %s608, %s617
          %s619 = smul.addr %s615, 64
          %s620 = scalar_lea.hbm %s5, %s619
          %s621 = sshll.u32 %s611, 4
          %s622 = int_to_ptr.vmem [resolvable:$true] %s621
          %627 = dma.vmem_to_hbm [thread:$0]  %s622, 128, %s620, %s608, 64, 64, 4
        $region48: #{tpu_custom_call.1} parent=39 // pred_fallthru
          _
      $region40: #{tpu_custom_call.1} parent=5 // pred_fallthru
        _
      %p628 = scmp.le.s32.totalorder 2, %s17
      // Predicated region
      $region49: #{tpu_custom_call.1} parent=5 // pred_check
        %p629 = pneg %p628
      $region50: #{tpu_custom_call.1} parent=5 // pred_check_branch
        %631 = sbr.rel (%p629) target = $region52
      $region51: #{tpu_custom_call.1} parent=5 // pred_region
        %s632 = ssub.s32 %s17, 2
        // Predicated region
        $region53: #{tpu_custom_call.1} parent=51 // pred_check
          %p633 = pneg %p166
        $region54: #{tpu_custom_call.1} parent=51 // pred_check_branch
          %635 = sbr.rel (%p633) target = $region56
        $region55: #{tpu_custom_call.1} parent=51 // pred_region
          %s636 = sand.u32 %s151, 1
          %s637 = scalar_lea.sflag [#allocation4], %s636
          %s638 = sand.u32 %s151, 1
          %s639 = smul.addr %s638, 8
          %s640 = scalar_lea.vmem [#allocation5], %s639
          %641 = dma.done %s637, 128
        $region56: #{tpu_custom_call.1} parent=51 // pred_fallthru
          _
      $region52: #{tpu_custom_call.1} parent=5 // pred_fallthru
        _
    $region6: #{tpu_custom_call.1} parent=1 // loop_footer
      %s21 = sadd.s32 1, %s17
    $region7: #{tpu_custom_call.1} parent=1 // loop_footer_branch
      %16 = sbr.rel target = $region3
    $region8: #{tpu_custom_call.1} parent=1 // loop_exit
      _
    %642 = vsyncpa [#allocation3], 1
    %s643 = scalar_lea.sflag [#allocation3], 1
    %644 = vsyncpa %s643, 1
    %645 = vsyncpa [#allocation4], 1
    %s646 = scalar_lea.sflag [#allocation4], 1
    %647 = vsyncpa %s646, 1

</llo_original>
